<compile_context>
chip_gen: v5e
topology: v5e:2x2
jax: 0.10.0
libtpu: 0.0.40
codegen_flags: <defaults>
</compile_context>

<pallas_src>
import functools

import jax
import jax.numpy as jnp
from jax.experimental import pallas as pl
from jax.experimental.pallas import tpu as pltpu


def _nnmodel_kernel(x_ref, wft_ref, bf_ref, wc_ref, bc_ref, out_ref,
                    *, c_in: int, output_predictions: bool):
    # x_ref  : (B, C_in, HW)  NCHW input, spatial flattened (lane dim = HW)
    # wft_ref: (F, C_in)      1x1 conv ("features") weight, PyTorch layout
    # bf_ref : (F, 1)         conv bias
    # wc_ref : (F, NC)        classifier weight (in, out)
    # bc_ref : (1, NC)        classifier bias
    # out_ref: (B, NC)
    x = x_ref[...]                                   # (B, C_in, HW)
    wft = wft_ref[...]                               # (F, C_in)

    # features: 1x1 conv.  K = C_in is tiny, so keep it OFF the MXU: unrolled
    # broadcast multiply-adds on full 128-lane vregs (lane dim = HW).
    acc = wft[None, :, 0:1] * x[:, 0:1, :]           # (B, F, HW)
    for c in range(1, c_in):
        acc = acc + wft[None, :, c:c + 1] * x[:, c:c + 1, :]

    feats = jnp.maximum(acc + bf_ref[...][None, :, :], 0.0)   # bias + ReLU

    # AdaptiveAvgPool2d((1,1)) == mean over all spatial positions (lane reduce).
    pooled = jnp.mean(feats, axis=-1)                          # (B, F)

    # classifier: Linear(num_ftrs -> nb_classes), batched over B in one shot.
    logits = jnp.dot(pooled, wc_ref[...],
                     preferred_element_type=jnp.float32) + bc_ref[...]

    if output_predictions:
        # Softmax(dim=-1); approx reciprocal runs on the otherwise-idle EUP.
        m = jnp.max(logits, axis=-1, keepdims=True)
        e = jnp.exp(logits - m)
        logits = e * pl.reciprocal(jnp.sum(e, axis=-1, keepdims=True),
                                   approx=True)

    out_ref[...] = logits.astype(out_ref.dtype)


def nnmodel_forward(x_nchw, w_conv, b_conv, w_fc, b_fc, *,
                    output_predictions=False):
    """NNModel forward with a synthetic 1x1-conv+ReLU basemodel.

    x_nchw: (B, C_in, H, W) float32 (PyTorch layout; no transpose needed).
    w_conv: (F, C_in) 1x1 conv weight;  b_conv: (F,)
    w_fc  : (NC, F)   Linear weight (PyTorch layout);  b_fc: (NC,)
    Returns (B, NC) logits (or softmax probabilities).
    """
    B, C_in, H, W = x_nchw.shape
    F = w_conv.shape[0]
    NC = w_fc.shape[0]
    HW = H * W

    x3 = x_nchw.reshape(B, C_in, HW)      # lane dim = HW (multiple of 128)
    bf2 = b_conv.reshape(F, 1)
    wc2 = w_fc.T                          # (F, NC)
    bc2 = b_fc.reshape(1, NC)

    kernel = functools.partial(_nnmodel_kernel, c_in=C_in,
                               output_predictions=output_predictions)

    flops = 2 * B * C_in * F * HW + 3 * B * F * HW + 2 * B * F * NC
    bytes_accessed = 4 * (x3.size + w_conv.size + bf2.size + wc2.size
                          + bc2.size + B * NC)

    return pl.pallas_call(
        kernel,
        out_shape=jax.ShapeDtypeStruct((B, NC), jnp.float32),
        grid_spec=pltpu.PrefetchScalarGridSpec(
            num_scalar_prefetch=0,
            grid=(1,),                    # single step: whole problem at once
            in_specs=[
                pl.BlockSpec((B, C_in, HW), lambda i: (0, 0, 0)),
                pl.BlockSpec((F, C_in), lambda i: (0, 0)),
                pl.BlockSpec((F, 1), lambda i: (0, 0)),
                pl.BlockSpec((F, NC), lambda i: (0, 0)),
                pl.BlockSpec((1, NC), lambda i: (0, 0)),
            ],
            out_specs=pl.BlockSpec((B, NC), lambda i: (0, 0)),
        ),
        compiler_params=pltpu.CompilerParams(
            dimension_semantics=("arbitrary",)),
        cost_estimate=pl.CostEstimate(
            flops=flops,
            transcendentals=B * NC if output_predictions else 0,
            bytes_accessed=bytes_accessed),
    )(x3, w_conv, bf2, wc2, bc2)


def reference_forward(x_nchw, w_conv, b_conv, w_fc, b_fc, *,
                      output_predictions=False):
    """Pure-JAX reference of the same forward pass (NCHW, PyTorch layouts)."""
    feats = jnp.maximum(
        jnp.einsum("bchw,fc->bfhw", x_nchw, w_conv)
        + b_conv[None, :, None, None], 0.0)            # features + ReLU
    pooled = jnp.mean(feats, axis=(2, 3))               # AdaptiveAvgPool2d(1,1)
    logits = pooled @ w_fc.T + b_fc                     # classifier
    if output_predictions:
        return jax.nn.softmax(logits, axis=-1)
    return logits


if __name__ == "__main__":
    # Small shapes consistent with the module's forward.
    B, C_in, H, W = 2, 4, 16, 16          # input NCHW (2, 4, 16, 16)
    NUM_FTRS, NB_CLASSES = 32, 8

    key = jax.random.PRNGKey(0)
    k_x, k_wf, k_bf, k_wc, k_bc = jax.random.split(key, 5)

    x_nchw = jax.random.normal(k_x, (B, C_in, H, W), dtype=jnp.float32)

    # Deterministic params (synthetic basemodel = 1x1 conv + ReLU), PyTorch layouts.
    w_conv = jax.random.normal(k_wf, (NUM_FTRS, C_in), dtype=jnp.float32) * 0.1
    b_conv = jax.random.normal(k_bf, (NUM_FTRS,), dtype=jnp.float32) * 0.01
    w_fc = jax.random.normal(k_wc, (NB_CLASSES, NUM_FTRS), dtype=jnp.float32) * 0.1
    b_fc = jax.random.normal(k_bc, (NB_CLASSES,), dtype=jnp.float32) * 0.01

    # Path 1: output_predictions=False (raw logits).
    out = nnmodel_forward(x_nchw, w_conv, b_conv, w_fc, b_fc,
                          output_predictions=False)
    out = jax.block_until_ready(out)
    ref = reference_forward(x_nchw, w_conv, b_conv, w_fc, b_fc,
                            output_predictions=False)
    assert out.shape == (B, NB_CLASSES)
    assert jnp.allclose(out, ref, atol=1e-4, rtol=1e-4), "logits mismatch"

    # Path 2: output_predictions=True (softmax) — now validated too.
    probs = nnmodel_forward(x_nchw, w_conv, b_conv, w_fc, b_fc,
                            output_predictions=True)
    probs = jax.block_until_ready(probs)
    ref_p = reference_forward(x_nchw, w_conv, b_conv, w_fc, b_fc,
                              output_predictions=True)
    # approx reciprocal (EUP) has ~1e-4 relative error -> slightly looser tol.
    assert jnp.allclose(probs, ref_p, atol=2e-3, rtol=2e-3), "softmax mismatch"
    assert jnp.allclose(jnp.sum(probs, axis=-1), 1.0, atol=2e-3)

    print("KERNEL_OK")
</pallas_src>

<mosaic_0001>
module attributes {stable_mosaic.version = 11 : i64} {
  func.func @_nnmodel_kernel(%arg0: i32, %arg1: memref<2x4x256xf32, #tpu.memory_space<vmem>>, %arg2: memref<32x4xf32, #tpu.memory_space<vmem>>, %arg3: memref<32x1xf32, #tpu.memory_space<vmem>>, %arg4: memref<32x8xf32, #tpu.memory_space<vmem>>, %arg5: memref<1x8xf32, #tpu.memory_space<vmem>>, %arg6: memref<2x8xf32, #tpu.memory_space<vmem>>) attributes {dimension_semantics = [#tpu.dimension_semantics<arbitrary>], iteration_bounds = array<i64: 1>, scalar_prefetch = 0 : i64, scratch_operands = 0 : i64, tpu.core_type = #tpu.core_type<tc>, window_params = [{pipeline_mode = #tpu.pipeline_mode<synchronous>, transform_indices = @transform_0, window_bounds = array<i64: 2, 4, 256>}, {pipeline_mode = #tpu.pipeline_mode<synchronous>, transform_indices = @transform_1, window_bounds = array<i64: 32, 4>}, {pipeline_mode = #tpu.pipeline_mode<synchronous>, transform_indices = @transform_2, window_bounds = array<i64: 32, 1>}, {pipeline_mode = #tpu.pipeline_mode<synchronous>, transform_indices = @transform_3, window_bounds = array<i64: 32, 8>}, {pipeline_mode = #tpu.pipeline_mode<synchronous>, transform_indices = @transform_4, window_bounds = array<i64: 1, 8>}, {pipeline_mode = #tpu.pipeline_mode<synchronous>, transform_indices = @transform_5, window_bounds = array<i64: 2, 8>}]} {
    %c0 = arith.constant 0 : index
    %c0_0 = arith.constant 0 : index
    %c0_1 = arith.constant 0 : index
    %0 = vector.load %arg1[%c0, %c0_0, %c0_1] : memref<2x4x256xf32, #tpu.memory_space<vmem>>, vector<2x4x256xf32>
    %c0_2 = arith.constant 0 : index
    %c0_3 = arith.constant 0 : index
    %1 = vector.load %arg2[%c0_2, %c0_3] : memref<32x4xf32, #tpu.memory_space<vmem>>, vector<32x4xf32>
    %2 = vector.extract_strided_slice %1 {offsets = [0, 0], sizes = [32, 1], strides = [1, 1]} : vector<32x4xf32> to vector<32x1xf32>
    %3 = vector.shape_cast %2 : vector<32x1xf32> to vector<1x32x1xf32>
    %4 = vector.extract_strided_slice %0 {offsets = [0, 0, 0], sizes = [2, 1, 256], strides = [1, 1, 1]} : vector<2x4x256xf32> to vector<2x1x256xf32>
    %5 = vector.broadcast %3 : vector<1x32x1xf32> to vector<2x32x256xf32>
    %6 = vector.broadcast %4 : vector<2x1x256xf32> to vector<2x32x256xf32>
    %7 = arith.mulf %5, %6 : vector<2x32x256xf32>
    %8 = vector.extract_strided_slice %1 {offsets = [0, 1], sizes = [32, 1], strides = [1, 1]} : vector<32x4xf32> to vector<32x1xf32>
    %9 = vector.shape_cast %8 : vector<32x1xf32> to vector<1x32x1xf32>
    %10 = vector.extract_strided_slice %0 {offsets = [0, 1, 0], sizes = [2, 1, 256], strides = [1, 1, 1]} : vector<2x4x256xf32> to vector<2x1x256xf32>
    %11 = vector.broadcast %9 : vector<1x32x1xf32> to vector<2x32x256xf32>
    %12 = vector.broadcast %10 : vector<2x1x256xf32> to vector<2x32x256xf32>
    %13 = arith.mulf %11, %12 : vector<2x32x256xf32>
    %14 = arith.addf %7, %13 : vector<2x32x256xf32>
    %15 = vector.extract_strided_slice %1 {offsets = [0, 2], sizes = [32, 1], strides = [1, 1]} : vector<32x4xf32> to vector<32x1xf32>
    %16 = vector.shape_cast %15 : vector<32x1xf32> to vector<1x32x1xf32>
    %17 = vector.extract_strided_slice %0 {offsets = [0, 2, 0], sizes = [2, 1, 256], strides = [1, 1, 1]} : vector<2x4x256xf32> to vector<2x1x256xf32>
    %18 = vector.broadcast %16 : vector<1x32x1xf32> to vector<2x32x256xf32>
    %19 = vector.broadcast %17 : vector<2x1x256xf32> to vector<2x32x256xf32>
    %20 = arith.mulf %18, %19 : vector<2x32x256xf32>
    %21 = arith.addf %14, %20 : vector<2x32x256xf32>
    %22 = vector.extract_strided_slice %1 {offsets = [0, 3], sizes = [32, 1], strides = [1, 1]} : vector<32x4xf32> to vector<32x1xf32>
    %23 = vector.shape_cast %22 : vector<32x1xf32> to vector<1x32x1xf32>
    %24 = vector.extract_strided_slice %0 {offsets = [0, 3, 0], sizes = [2, 1, 256], strides = [1, 1, 1]} : vector<2x4x256xf32> to vector<2x1x256xf32>
    %25 = vector.broadcast %23 : vector<1x32x1xf32> to vector<2x32x256xf32>
    %26 = vector.broadcast %24 : vector<2x1x256xf32> to vector<2x32x256xf32>
    %27 = arith.mulf %25, %26 : vector<2x32x256xf32>
    %28 = arith.addf %21, %27 : vector<2x32x256xf32>
    %c0_4 = arith.constant 0 : index
    %c0_5 = arith.constant 0 : index
    %29 = vector.load %arg3[%c0_4, %c0_5] : memref<32x1xf32, #tpu.memory_space<vmem>>, vector<32x1xf32>
    %30 = vector.shape_cast %29 : vector<32x1xf32> to vector<1x32x1xf32>
    %31 = vector.broadcast %30 : vector<1x32x1xf32> to vector<2x32x256xf32>
    %32 = arith.addf %28, %31 : vector<2x32x256xf32>
    %cst = arith.constant 0.000000e+00 : f32
    %33 = vector.broadcast %cst : f32 to vector<2x32x256xf32>
    %34 = arith.maximumf %32, %33 : vector<2x32x256xf32>
    %cst_6 = arith.constant dense<0.000000e+00> : vector<2x32xf32>
    %35 = vector.multi_reduction <add>, %34, %cst_6 [2] : vector<2x32x256xf32> to vector<2x32xf32>
    %cst_7 = arith.constant 2.560000e+02 : f32
    %36 = vector.broadcast %cst_7 : f32 to vector<2x32xf32>
    %37 = arith.divf %35, %36 : vector<2x32xf32>
    %c0_8 = arith.constant 0 : index
    %c0_9 = arith.constant 0 : index
    %38 = vector.load %arg4[%c0_8, %c0_9] : memref<32x8xf32, #tpu.memory_space<vmem>>, vector<32x8xf32>
    %cst_10 = arith.constant dense<0.000000e+00> : vector<2x8xf32>
    %39 = tpu.matmul %37, %38, %cst_10 {dimension_numbers = #tpu.dot_dimension_numbers<[1], [0], [0], [1], [0, 0, 1, 1], [], []>} : vector<2x32xf32>, vector<32x8xf32>, vector<2x8xf32> -> vector<2x8xf32>
    %c0_11 = arith.constant 0 : index
    %c0_12 = arith.constant 0 : index
    %40 = vector.load %arg5[%c0_11, %c0_12] : memref<1x8xf32, #tpu.memory_space<vmem>>, vector<1x8xf32>
    %41 = vector.broadcast %40 : vector<1x8xf32> to vector<2x8xf32>
    %42 = arith.addf %39, %41 : vector<2x8xf32>
    %c0_13 = arith.constant 0 : index
    %c0_14 = arith.constant 0 : index
    %43 = vector.load %arg6[%c0_13, %c0_14] : memref<2x8xf32, #tpu.memory_space<vmem>>, vector<2x8xf32>
    tpu.vector_store %arg6[%c0_13, %c0_14], %42 {strides = array<i32>} : memref<2x8xf32, #tpu.memory_space<vmem>>, vector<2x8xf32>,
    return
  }
  func.func @transform_0(%arg0: i32) -> (i32, i32, i32) {
    %c0_i32 = arith.constant 0 : i32
    %c0_i32_0 = arith.constant 0 : i32
    %c0_i32_1 = arith.constant 0 : i32
    %c0_i32_2 = arith.constant 0 : i32
    return %c0_i32, %c0_i32_0, %c0_i32_1 : i32, i32, i32
  }
  func.func @transform_1(%arg0: i32) -> (i32, i32) {
    %c0_i32 = arith.constant 0 : i32
    %c0_i32_0 = arith.constant 0 : i32
    %c0_i32_1 = arith.constant 0 : i32
    return %c0_i32, %c0_i32_0 : i32, i32
  }
  func.func @transform_2(%arg0: i32) -> (i32, i32) {
    %c0_i32 = arith.constant 0 : i32
    %c0_i32_0 = arith.constant 0 : i32
    %c0_i32_1 = arith.constant 0 : i32
    return %c0_i32, %c0_i32_0 : i32, i32
  }
  func.func @transform_3(%arg0: i32) -> (i32, i32) {
    %c0_i32 = arith.constant 0 : i32
    %c0_i32_0 = arith.constant 0 : i32
    %c0_i32_1 = arith.constant 0 : i32
    return %c0_i32, %c0_i32_0 : i32, i32
  }
  func.func @transform_4(%arg0: i32) -> (i32, i32) {
    %c0_i32 = arith.constant 0 : i32
    %c0_i32_0 = arith.constant 0 : i32
    %c0_i32_1 = arith.constant 0 : i32
    return %c0_i32, %c0_i32_0 : i32, i32
  }
  func.func @transform_5(%arg0: i32) -> (i32, i32) {
    %c0_i32 = arith.constant 0 : i32
    %c0_i32_0 = arith.constant 0 : i32
    %c0_i32_1 = arith.constant 0 : i32
    return %c0_i32, %c0_i32_0 : i32, i32
  }
}

</mosaic_0001>

<llo_original>
// kernel: tpu_custom_call.1
$region0: #{tpu_custom_call.1}
  #allocation0 [shape = 'u32[]', space=smem, size = 0x4, offset = 0x4, fixed_abs, tag = 'smem constant byte address 0x4 - core index']
  #allocation1 [shape = 'u32[72,128]{1,0:T(1,128)}', space=vmem, size = 0x9000, scoped, tag = 'internal scratch']
  %s0 = inlined_call_operand.vmem [shape: f32[2,4,256], index: 0, kind: input, shape index: {}]
  %s1 = inlined_call_operand.vmem [shape: f32[32,4], index: 1, kind: input, shape index: {}]
  %s2 = inlined_call_operand.vmem [shape: f32[32,1], index: 2, kind: input, shape index: {}]
  %s3 = inlined_call_operand.vmem [shape: f32[32,8], index: 3, kind: input, shape index: {}]
  %s4 = inlined_call_operand.vmem [shape: f32[1,8], index: 4, kind: input, shape index: {}]
  %s5 = inlined_call_operand.hbm [shape: f32[2,8], index: 5, kind: output, shape index: {}]
  %s6 = sld [smem:[#allocation0]]
  $region30: #{tpu_custom_call.1} parent=0
    _
  %s8 = ssub.s32 1, %s6
  %s9 = scalar_select 0, %s8, %s6
  $region1: #{tpu_custom_call.1} parent=0
    #allocation2 [shape = 'u8[1024]{0}', space=vmem, size = 0x400, scoped, tag = 'output window, operand 0, single buffered']
    #allocation3 [shape = 's32[1]{0}', space=sflag, size = 0x4, scoped, tag = 'scoped memory for tpu_custom_call.1']
    %10 = vsyncpa [#allocation3], 0
    // Predicated region
    $region2: #{tpu_custom_call.1} parent=1 // pred_check
      _
    $region3: #{tpu_custom_call.1} parent=1 // pred_check_branch
      %12 = sbr.rel (0) target = $region5
    $region4: #{tpu_custom_call.1} parent=1 // pred_region
      _
    $region5: #{tpu_custom_call.1} parent=1 // pred_fallthru
      _
    // Predicated region
    $region6: #{tpu_custom_call.1} parent=1 // pred_check
      _
    $region7: #{tpu_custom_call.1} parent=1 // pred_check_branch
      %14 = sbr.rel (0) target = $region9
    $region8: #{tpu_custom_call.1} parent=1 // pred_region
      _
    $region9: #{tpu_custom_call.1} parent=1 // pred_fallthru
      _
    // Predicated region
    $region10: #{tpu_custom_call.1} parent=1 // pred_check
      _
    $region11: #{tpu_custom_call.1} parent=1 // pred_check_branch
      %16 = sbr.rel (0) target = $region13
    $region12: #{tpu_custom_call.1} parent=1 // pred_region
      _
    $region13: #{tpu_custom_call.1} parent=1 // pred_fallthru
      _
    // Predicated region
    $region14: #{tpu_custom_call.1} parent=1 // pred_check
      _
    $region15: #{tpu_custom_call.1} parent=1 // pred_check_branch
      %18 = sbr.rel (0) target = $region17
    $region16: #{tpu_custom_call.1} parent=1 // pred_region
      _
    $region17: #{tpu_custom_call.1} parent=1 // pred_fallthru
      _
    // Predicated region
    $region18: #{tpu_custom_call.1} parent=1 // pred_check
      _
    $region19: #{tpu_custom_call.1} parent=1 // pred_check_branch
      %20 = sbr.rel (0) target = $region21
    $region20: #{tpu_custom_call.1} parent=1 // pred_region
      _
    $region21: #{tpu_custom_call.1} parent=1 // pred_fallthru
      _
    %v21 = vld [vmem:[%s0] sm:$0xff]
    %v22 = vld [vmem:[%s0 + $0x8] sm:$0xff]
    %v23 = vld [vmem:[%s1] sm:$0xff]
    %v24 = vld [vmem:[%s1 + $0x8] sm:$0xff]
    %v25 = vld [vmem:[%s1 + $0x10] sm:$0xff]
    %v26 = vld [vmem:[%s1 + $0x18] sm:$0xff]
    %28 = vset.pattern.permute.xlu0 0
    %29 = vperm.xlu0 %28, %v23
    %v30 = vpop.permute.xlu0 %29
    %33 = vset.pattern.permute.xlu0 0
    %34 = vperm.xlu0 %33, %v24
    %v35 = vpop.permute.xlu0 %34
    %38 = vset.pattern.permute.xlu0 0
    %39 = vperm.xlu0 %38, %v25
    %v40 = vpop.permute.xlu0 %39
    %43 = vset.pattern.permute.xlu0 0
    %44 = vperm.xlu0 %43, %v26
    %v45 = vpop.permute.xlu0 %44
    %v49 = vperm.slane %v21, 0
    %v50 = vperm.slane %v21, 4
    %v51 = vperm.slane %v22, 0
    %v52 = vperm.slane %v22, 4
    %v57 = vperm.slane %v49, 0
    %v58 = vperm.slane %v50, 0
    %v59 = vperm.slane %v51, 0
    %v60 = vperm.slane %v52, 0
    %v61 = vmul.f32 %v30, %v57
    %v62 = vmul.f32 %v30, %v58
    %v63 = vmul.f32 %v35, %v57
    %v64 = vmul.f32 %v35, %v58
    %v65 = vmul.f32 %v40, %v57
    %v66 = vmul.f32 %v40, %v58
    %v67 = vmul.f32 %v45, %v57
    %v68 = vmul.f32 %v45, %v58
    %v69 = vmul.f32 %v30, %v59
    %v70 = vmul.f32 %v30, %v60
    %v71 = vmul.f32 %v35, %v59
    %v72 = vmul.f32 %v35, %v60
    %v73 = vmul.f32 %v40, %v59
    %v74 = vmul.f32 %v40, %v60
    %v75 = vmul.f32 %v45, %v59
    %v76 = vmul.f32 %v45, %v60
    %77 = vset.pattern.permute.xlu0 1
    %78 = vperm.xlu0 %77, %v23
    %v79 = vpop.permute.xlu0 %78
    %81 = vset.pattern.permute.xlu0 1
    %82 = vperm.xlu0 %81, %v24
    %v83 = vpop.permute.xlu0 %82
    %85 = vset.pattern.permute.xlu0 1
    %86 = vperm.xlu0 %85, %v25
    %v87 = vpop.permute.xlu0 %86
    %89 = vset.pattern.permute.xlu0 1
    %90 = vperm.xlu0 %89, %v26
    %v91 = vpop.permute.xlu0 %90
    %v93 = vperm.slane %v21, 1
    %v94 = vperm.slane %v21, 5
    %v95 = vperm.slane %v22, 1
    %v96 = vperm.slane %v22, 5
    %v101 = vperm.slane %v93, 1
    %v102 = vperm.slane %v94, 1
    %v103 = vperm.slane %v95, 1
    %v104 = vperm.slane %v96, 1
    %v105 = vmul.f32 %v79, %v101
    %v106 = vmul.f32 %v79, %v102
    %v107 = vmul.f32 %v83, %v101
    %v108 = vmul.f32 %v83, %v102
    %v109 = vmul.f32 %v87, %v101
    %v110 = vmul.f32 %v87, %v102
    %v111 = vmul.f32 %v91, %v101
    %v112 = vmul.f32 %v91, %v102
    %v113 = vmul.f32 %v79, %v103
    %v114 = vmul.f32 %v79, %v104
    %v115 = vmul.f32 %v83, %v103
    %v116 = vmul.f32 %v83, %v104
    %v117 = vmul.f32 %v87, %v103
    %v118 = vmul.f32 %v87, %v104
    %v119 = vmul.f32 %v91, %v103
    %v120 = vmul.f32 %v91, %v104
    %v121 = vadd.f32 %v61, %v105
    %v122 = vadd.f32 %v62, %v106
    %v123 = vadd.f32 %v63, %v107
    %v124 = vadd.f32 %v64, %v108
    %v125 = vadd.f32 %v65, %v109
    %v126 = vadd.f32 %v66, %v110
    %v127 = vadd.f32 %v67, %v111
    %v128 = vadd.f32 %v68, %v112
    %v129 = vadd.f32 %v69, %v113
    %v130 = vadd.f32 %v70, %v114
    %v131 = vadd.f32 %v71, %v115
    %v132 = vadd.f32 %v72, %v116
    %v133 = vadd.f32 %v73, %v117
    %v134 = vadd.f32 %v74, %v118
    %v135 = vadd.f32 %v75, %v119
    %v136 = vadd.f32 %v76, %v120
    %137 = vset.pattern.permute.xlu0 2
    %138 = vperm.xlu0 %137, %v23
    %v139 = vpop.permute.xlu0 %138
    %141 = vset.pattern.permute.xlu0 2
    %142 = vperm.xlu0 %141, %v24
    %v143 = vpop.permute.xlu0 %142
    %145 = vset.pattern.permute.xlu0 2
    %146 = vperm.xlu0 %145, %v25
    %v147 = vpop.permute.xlu0 %146
    %149 = vset.pattern.permute.xlu0 2
    %150 = vperm.xlu0 %149, %v26
    %v151 = vpop.permute.xlu0 %150
    %v153 = vperm.slane %v21, 2
    %v154 = vperm.slane %v21, 6
    %v155 = vperm.slane %v22, 2
    %v156 = vperm.slane %v22, 6
    %v161 = vperm.slane %v153, 2
    %v162 = vperm.slane %v154, 2
    %v163 = vperm.slane %v155, 2
    %v164 = vperm.slane %v156, 2
    %v165 = vmul.f32 %v139, %v161
    %v166 = vmul.f32 %v139, %v162
    %v167 = vmul.f32 %v143, %v161
    %v168 = vmul.f32 %v143, %v162
    %v169 = vmul.f32 %v147, %v161
    %v170 = vmul.f32 %v147, %v162
    %v171 = vmul.f32 %v151, %v161
    %v172 = vmul.f32 %v151, %v162
    %v173 = vmul.f32 %v139, %v163
    %v174 = vmul.f32 %v139, %v164
    %v175 = vmul.f32 %v143, %v163
    %v176 = vmul.f32 %v143, %v164
    %v177 = vmul.f32 %v147, %v163
    %v178 = vmul.f32 %v147, %v164
    %v179 = vmul.f32 %v151, %v163
    %v180 = vmul.f32 %v151, %v164
    %v181 = vadd.f32 %v121, %v165
    %v182 = vadd.f32 %v122, %v166
    %v183 = vadd.f32 %v123, %v167
    %v184 = vadd.f32 %v124, %v168
    %v185 = vadd.f32 %v125, %v169
    %v186 = vadd.f32 %v126, %v170
    %v187 = vadd.f32 %v127, %v171
    %v188 = vadd.f32 %v128, %v172
    %v189 = vadd.f32 %v129, %v173
    %v190 = vadd.f32 %v130, %v174
    %v191 = vadd.f32 %v131, %v175
    %v192 = vadd.f32 %v132, %v176
    %v193 = vadd.f32 %v133, %v177
    %v194 = vadd.f32 %v134, %v178
    %v195 = vadd.f32 %v135, %v179
    %v196 = vadd.f32 %v136, %v180
    %197 = vset.pattern.permute.xlu0 3
    %198 = vperm.xlu0 %197, %v23
    %v199 = vpop.permute.xlu0 %198
    %201 = vset.pattern.permute.xlu0 3
    %202 = vperm.xlu0 %201, %v24
    %v203 = vpop.permute.xlu0 %202
    %205 = vset.pattern.permute.xlu0 3
    %206 = vperm.xlu0 %205, %v25
    %v207 = vpop.permute.xlu0 %206
    %209 = vset.pattern.permute.xlu0 3
    %210 = vperm.xlu0 %209, %v26
    %v211 = vpop.permute.xlu0 %210
    %v213 = vperm.slane %v21, 3
    %v214 = vperm.slane %v21, 7
    %v215 = vperm.slane %v22, 3
    %v216 = vperm.slane %v22, 7
    %v221 = vperm.slane %v213, 3
    %v222 = vperm.slane %v214, 3
    %v223 = vperm.slane %v215, 3
    %v224 = vperm.slane %v216, 3
    %v225 = vmul.f32 %v199, %v221
    %v226 = vmul.f32 %v199, %v222
    %v227 = vmul.f32 %v203, %v221
    %v228 = vmul.f32 %v203, %v222
    %v229 = vmul.f32 %v207, %v221
    %v230 = vmul.f32 %v207, %v222
    %v231 = vmul.f32 %v211, %v221
    %v232 = vmul.f32 %v211, %v222
    %v233 = vmul.f32 %v199, %v223
    %v234 = vmul.f32 %v199, %v224
    %v235 = vmul.f32 %v203, %v223
    %v236 = vmul.f32 %v203, %v224
    %v237 = vmul.f32 %v207, %v223
    %v238 = vmul.f32 %v207, %v224
    %v239 = vmul.f32 %v211, %v223
    %v240 = vmul.f32 %v211, %v224
    %v241 = vadd.f32 %v181, %v225
    %v242 = vadd.f32 %v182, %v226
    %v243 = vadd.f32 %v183, %v227
    %v244 = vadd.f32 %v184, %v228
    %v245 = vadd.f32 %v185, %v229
    %v246 = vadd.f32 %v186, %v230
    %v247 = vadd.f32 %v187, %v231
    %v248 = vadd.f32 %v188, %v232
    %v249 = vadd.f32 %v189, %v233
    %v250 = vadd.f32 %v190, %v234
    %v251 = vadd.f32 %v191, %v235
    %v252 = vadd.f32 %v192, %v236
    %v253 = vadd.f32 %v193, %v237
    %v254 = vadd.f32 %v194, %v238
    %v255 = vadd.f32 %v195, %v239
    %v256 = vadd.f32 %v196, %v240
    %v257 = vld [vmem:[%s2] sm:$0xff]
    %v258 = vld [vmem:[%s2 + $0x8] sm:$0xff]
    %v259 = vld [vmem:[%s2 + $0x10] sm:$0xff]
    %v260 = vld [vmem:[%s2 + $0x18] sm:$0xff]
    %262 = vset.pattern.permute.xlu0 0
    %263 = vperm.xlu0 %262, %v257
    %v264 = vpop.permute.xlu0 %263
    %267 = vset.pattern.permute.xlu0 0
    %268 = vperm.xlu0 %267, %v258
    %v269 = vpop.permute.xlu0 %268
    %272 = vset.pattern.permute.xlu0 0
    %273 = vperm.xlu0 %272, %v259
    %v274 = vpop.permute.xlu0 %273
    %277 = vset.pattern.permute.xlu0 0
    %278 = vperm.xlu0 %277, %v260
    %v279 = vpop.permute.xlu0 %278
    %v281 = vadd.f32 %v241, %v264
    %v282 = vadd.f32 %v242, %v264
    %v283 = vadd.f32 %v243, %v269
    %v284 = vadd.f32 %v244, %v269
    %v285 = vadd.f32 %v245, %v274
    %v286 = vadd.f32 %v246, %v274
    %v287 = vadd.f32 %v247, %v279
    %v288 = vadd.f32 %v248, %v279
    %v289 = vadd.f32 %v249, %v264
    %v290 = vadd.f32 %v250, %v264
    %v291 = vadd.f32 %v251, %v269
    %v292 = vadd.f32 %v252, %v269
    %v293 = vadd.f32 %v253, %v274
    %v294 = vadd.f32 %v254, %v274
    %v295 = vadd.f32 %v255, %v279
    %v296 = vadd.f32 %v256, %v279
    %v297 = vmax.f32 %v281, 0.0
    %v298 = vmax.f32 %v282, 0.0
    %v299 = vmax.f32 %v283, 0.0
    %v300 = vmax.f32 %v284, 0.0
    %v301 = vmax.f32 %v285, 0.0
    %v302 = vmax.f32 %v286, 0.0
    %v303 = vmax.f32 %v287, 0.0
    %v304 = vmax.f32 %v288, 0.0
    %v305 = vmax.f32 %v289, 0.0
    %v306 = vmax.f32 %v290, 0.0
    %v307 = vmax.f32 %v291, 0.0
    %v308 = vmax.f32 %v292, 0.0
    %v309 = vmax.f32 %v293, 0.0
    %v310 = vmax.f32 %v294, 0.0
    %v311 = vmax.f32 %v295, 0.0
    %v312 = vmax.f32 %v296, 0.0
    %v313 = vadd.f32 %v297, %v298
    %314 = vadd.xlane.f32.xlu0 %v313
    %v315 = vpop.xlane.xlu0 %314
    %v316 = vadd.f32 %v299, %v300
    %317 = vadd.xlane.f32.xlu0 %v316
    %v318 = vpop.xlane.xlu0 %317
    %v319 = vadd.f32 %v301, %v302
    %320 = vadd.xlane.f32.xlu0 %v319
    %v321 = vpop.xlane.xlu0 %320
    %v322 = vadd.f32 %v303, %v304
    %323 = vadd.xlane.f32.xlu0 %v322
    %v324 = vpop.xlane.xlu0 %323
    %v325 = vadd.f32 %v305, %v306
    %326 = vadd.xlane.f32.xlu0 %v325
    %v327 = vpop.xlane.xlu0 %326
    %v328 = vadd.f32 %v307, %v308
    %329 = vadd.xlane.f32.xlu0 %v328
    %v330 = vpop.xlane.xlu0 %329
    %v331 = vadd.f32 %v309, %v310
    %332 = vadd.xlane.f32.xlu0 %v331
    %v333 = vpop.xlane.xlu0 %332
    %v334 = vadd.f32 %v311, %v312
    %335 = vadd.xlane.f32.xlu0 %v334
    %v336 = vpop.xlane.xlu0 %335
    %v337 = vrcp.pop 256.0
    %v338 = vmul.f32 256.0, %v337
    %v339 = vsub.f32 1.0, %v338
    %v340 = vmul.f32 %v337, %v339
    %v341 = vadd.f32 %v337, %v340
    %vm342 = vweird.f32 %v337
    %v343 = vsel %vm342, %v337, %v341
    %v344 = vmul.f32 %v315, %v343
    %v345 = vmul.f32 %v318, %v343
    %v346 = vmul.f32 %v321, %v343
    %v347 = vmul.f32 %v324, %v343
    %v348 = vmul.f32 %v327, %v343
    %v349 = vmul.f32 %v330, %v343
    %v350 = vmul.f32 %v333, %v343
    %v351 = vmul.f32 %v336, %v343
    %v352 = vld [vmem:[%s3] sm:$0xff]
    %v353 = vld [vmem:[%s3 + $0x8] sm:$0xff]
    %v354 = vld [vmem:[%s3 + $0x10] sm:$0xff]
    %v355 = vld [vmem:[%s3 + $0x18] sm:$0xff]
    %v356 = vld [vmem:[%s4] sm:$0x1]
    %v358 = vperm.slane %v356, 0
    %v368 = vlaneseq
    %v369 = vand.u32 %v368, 127
    %v370 = vperm.slane %v344, %v369
    %v371 = vadd.s32 %v369, 4294967288
    %v372 = vperm.slane %v345, %v371
    %vm373 = vcmask 130112
    %v374 = vsel %vm373, %v372, %v370
    %v375 = vadd.s32 %v369, 4294967280
    %v376 = vperm.slane %v346, %v375
    %vm377 = vcmask 195712
    %v378 = vsel %vm377, %v376, %v374
    %v379 = vadd.s32 %v369, 4294967272
    %v380 = vperm.slane %v347, %v379
    %vm381 = vcmask 261312
    %v382 = vsel %vm381, %v380, %v378
    %v383 = vperm.slane %v348, %v369
    %v384 = vperm.slane %v349, %v371
    %v385 = vsel %vm373, %v384, %v383
    %v386 = vperm.slane %v350, %v375
    %v387 = vsel %vm377, %v386, %v385
    %v388 = vperm.slane %v351, %v379
    %v389 = vsel %vm381, %v388, %v387
    %vm390 = vcmask 1041409
    %v391 = vsel %vm390, %v389, %v382
    %vm392 = vcmask 261120
    %v393 = vsel %vm392, %v391, 0
    %395 = vmatpush.msra.mxu0 0.0
    %396 = vmatpush.msra.mxu0 0.0
    %397 = vmatpush.msra.mxu0 0.0
    %398 = vmatpush.msra.mxu0 0.0
    %399 = vmatpush.msra.mxu0 0.0
    %400 = vmatpush.msra.mxu0 0.0
    %401 = vmatpush.msra.mxu0 0.0
    %402 = vmatpush.msra.mxu0 0.0
    %403 = vmatpush.msra.mxu0 0.0
    %404 = vmatpush.msra.mxu0 0.0
    %405 = vmatpush.msra.mxu0 0.0
    %406 = vmatpush.msra.mxu0 0.0
    %407 = vmatpush.msra.mxu0 %v355
    %408 = vmatpush.msra.mxu0 %v354
    %409 = vmatpush.msra.mxu0 %v353
    %410 = vmatpush.msra.mxu0 %v352
    %411 = vmatmul.f32.gmra.mxu0 %v393
    %v412 = vpop.f32.mrf.mxu0
    %v413 = vadd.f32 %v358, %v412
    %414 = vdwg.mxu0
    %vm415 = vcmask 58368
    %416 = vst.msk [vmem:[#allocation2] sm:$0x3] %vm415, %v413
    // Predicated region
    $region22: #{tpu_custom_call.1} parent=1 // pred_check
      _
    $region23: #{tpu_custom_call.1} parent=1 // pred_check_branch
      %418 = sbr.rel (0) target = $region25
    $region24: #{tpu_custom_call.1} parent=1 // pred_region
      %420 = vsyncadd [#allocation3], 0
      %s422 = sshll.u32 [#allocation2], 4
      %s423 = int_to_ptr.vmem [resolvable:$true] %s422
      %s424 = sshll.u32 %s5, 4
      %s425 = int_to_ptr.hbm [resolvable:$true] %s424
      %427 = dma.vmem_to_hbm [thread:$0]  %s423, 32, %s425, [#allocation3]
    $region25: #{tpu_custom_call.1} parent=1 // pred_fallthru
      _
    // Predicated region
    $region26: #{tpu_custom_call.1} parent=1 // pred_check
      _
    $region27: #{tpu_custom_call.1} parent=1 // pred_check_branch
      %429 = sbr.rel (0) target = $region29
    $region28: #{tpu_custom_call.1} parent=1 // pred_region
      %431 = dma.done [#allocation3], 32
    $region29: #{tpu_custom_call.1} parent=1 // pred_fallthru
      _
    %432 = vsyncpa [#allocation3], 1

</llo_original>
